<compile_context>
chip_gen: v5e
topology: v5e:2x2
jax: 0.10.0
libtpu: 0.0.40
codegen_flags: <defaults>
</compile_context>

<pallas_src>
import jax
import jax.numpy as jnp
from jax.experimental import pallas as pl
from jax.experimental.pallas import tpu as pltpu  # noqa: F401 (TPU backend)

B = 2
S = 16
HIDDEN = 32                # == pose_feature_dim (asserted equal in the module)
HEADS = 4
HEAD_DIM = HIDDEN // HEADS
POSE_SCALE = 0.5                         # `scale` argument passed to forward()
ATTN_SCALE = 1.0 / (HEAD_DIM ** 0.5)     # diffusers Attention: head_dim ** -0.5
RESCALE_OUTPUT_FACTOR = 1.0              # attn.rescale_output_factor


def _pose_adaptor_attn_kernel(x_ref, wqkv_ref, wmo_ref, bmo_ref, out_ref):
    # x_ref: (2, B*S, H) stacked [hidden_states, pose_feature]; leading-axis
    # slices are aligned and free.  hs is also the residual (spatial_norm /
    # group_norm are None in this config).
    hs = x_ref[0]
    pose = x_ref[1]

    # qkv_merge with POSE_SCALE pre-folded into weight/bias:
    #   merged = ((hs+pose) @ Wm + bm) * s + hs  ==  (hs+pose) @ (s*Wm) + s*bm + hs
    merged = (jnp.dot(hs + pose, wmo_ref[0],
                      preferred_element_type=jnp.float32)
              + bmo_ref[0:1, :] + hs)

    # Fused to_q / to_k / to_v (bias-free, diffusers default): one matmul
    # against the packed (H, 3H) weight, then static lane slices.
    # ATTN_SCALE is already folded into the Q columns.
    qkv = jnp.dot(merged, wqkv_ref[...], preferred_element_type=jnp.float32)
    q = qkv[:, :HIDDEN]                     # (B*S, H), pre-scaled
    k = qkv[:, HIDDEN:2 * HIDDEN]           # (B*S, H)
    v = qkv[:, 2 * HIDDEN:]                 # (B*S, H)

    # One transpose for the whole kernel (single XLU vxpose).
    k_t = k.T                               # (H, B*S)

    # Multi-head scaled dot-product attention: static Python loops over the
    # (tiny) batch and head dims.  Per-head contexts are assembled in
    # registers (lane-concat heads, sublane-concat batches) — no VMEM scratch.
    batch_ctx = []
    for b in range(B):
        r0 = b * S
        q_b = q[r0:r0 + S, :]               # (S, H)
        v_b = v[r0:r0 + S, :]               # (S, H)
        k_t_b = k_t[:, r0:r0 + S]           # (H, S) — one lane slice per batch
        head_ctx = []
        for h in range(HEADS):
            lo = h * HEAD_DIM
            scores = jnp.dot(q_b[:, lo:lo + HEAD_DIM],
                             k_t_b[lo:lo + HEAD_DIM, :],
                             preferred_element_type=jnp.float32)
            scores = scores - jnp.max(scores, axis=-1, keepdims=True)
            probs = jnp.exp(scores)
            inv = pl.reciprocal(jnp.sum(probs, axis=-1, keepdims=True),
                                approx=True)
            probs = probs * inv
            head_ctx.append(jnp.dot(probs, v_b[:, lo:lo + HEAD_DIM],
                                    preferred_element_type=jnp.float32))
        batch_ctx.append(jnp.concatenate(head_ctx, axis=1))   # (S, H)
    ctx = jnp.concatenate(batch_ctx, axis=0)                   # (B*S, H)

    # attn.to_out[0] (single full-width matmul), dropout (identity),
    # residual, rescale.
    out = (jnp.dot(ctx, wmo_ref[1], preferred_element_type=jnp.float32)
           + bmo_ref[1:2, :] + hs)
    if RESCALE_OUTPUT_FACTOR != 1.0:        # no-op divide not emitted
        out = out / RESCALE_OUTPUT_FACTOR
    out_ref[...] = out


def prepare_params(params):
    """One-time packing / constant folding of the module parameters.

    params = (wm, bm, wq, wk, wv, wo, bo), weights in (in, out) layout.
    Returns (wqkv, wmo, bmo):
      wqkv: (H, 3H)  = [Wq * ATTN_SCALE | Wk | Wv]
      wmo:  (2, H, H) = [Wm * POSE_SCALE, Wo]
      bmo:  (2, H)    = [bm * POSE_SCALE, bo]
    """
    wm, bm, wq, wk, wv, wo, bo = params
    wqkv = jnp.concatenate([wq * ATTN_SCALE, wk, wv], axis=1)
    wmo = jnp.stack([wm * POSE_SCALE, wo], axis=0)
    bmo = jnp.stack([bm.reshape(-1) * POSE_SCALE, bo.reshape(-1)], axis=0)
    return wqkv, wmo, bmo


def pose_adaptor_attn(hidden_states, pose_feature, packed_params):
    wqkv, wmo, bmo = packed_params
    Bdim, Sdim, H = hidden_states.shape

    # Stack the two activations into one operand (leading-axis slices are
    # free inside the kernel); batch folded into rows (contiguous reshape).
    x = jnp.stack([hidden_states, pose_feature], axis=0).reshape(
        2, Bdim * Sdim, H)

    out2d = pl.pallas_call(
        _pose_adaptor_attn_kernel,
        out_shape=jax.ShapeDtypeStruct((Bdim * Sdim, H), jnp.float32),
        # No grid: single invocation, all operands land in VMEM as full blocks
        # (no per-step pipeline overhead, no redundant weight double-buffers).
    )(x, wqkv, wmo, bmo)

    return out2d.reshape(Bdim, Sdim, H)


def reference(hs, pose, params):
    """Pure-JAX reference mirroring the PyTorch forward exactly
    (uses the original, un-folded parameters)."""
    wm, bm, wq, wk, wv, wo, bo = params
    merged = jnp.einsum('bsi,io->bso', hs + pose, wm) + bm
    merged = merged * POSE_SCALE + hs
    q = jnp.einsum('bsi,io->bso', merged, wq)
    k = jnp.einsum('bsi,io->bso', merged, wk)
    v = jnp.einsum('bsi,io->bso', merged, wv)

    def head_to_batch(x):  # attn.head_to_batch_dim
        return x.reshape(B, S, HEADS, HEAD_DIM).transpose(0, 2, 1, 3) \
                .reshape(B * HEADS, S, HEAD_DIM)

    qb, kb, vb = map(head_to_batch, (q, k, v))
    scores = jnp.einsum('bqd,bkd->bqk', qb, kb) * ATTN_SCALE
    probs = jax.nn.softmax(scores, axis=-1)
    ctx = jnp.einsum('bqk,bkd->bqd', probs, vb)
    ctx = ctx.reshape(B, HEADS, S, HEAD_DIM).transpose(0, 2, 1, 3) \
             .reshape(B, S, HIDDEN)                  # attn.batch_to_head_dim
    out = jnp.einsum('bsi,io->bso', ctx, wo) + bo
    out = out + hs                                   # residual_connection
    return out / RESCALE_OUTPUT_FACTOR


if __name__ == "__main__":
    key = jax.random.PRNGKey(0)
    keys = jax.random.split(key, 9)

    hidden_states = jax.random.normal(keys[0], (B, S, HIDDEN), jnp.float32)
    pose_feature = jax.random.normal(keys[1], (B, S, HIDDEN), jnp.float32)

    # NOTE: the PyTorch module zero-inits qkv_merge; we use small deterministic
    # non-zero synthetic weights so the merge path is actually exercised.
    sw = 0.05
    wm = jax.random.normal(keys[2], (HIDDEN, HIDDEN), jnp.float32) * sw
    bm = jax.random.normal(keys[3], (1, HIDDEN), jnp.float32) * sw
    wq = jax.random.normal(keys[4], (HIDDEN, HIDDEN), jnp.float32) * sw
    wk = jax.random.normal(keys[5], (HIDDEN, HIDDEN), jnp.float32) * sw
    wv = jax.random.normal(keys[6], (HIDDEN, HIDDEN), jnp.float32) * sw
    wo = jax.random.normal(keys[7], (HIDDEN, HIDDEN), jnp.float32) * sw
    bo = jax.random.normal(keys[8], (1, HIDDEN), jnp.float32) * sw
    params = (wm, bm, wq, wk, wv, wo, bo)

    # One-time param packing / constant folding (NOT on the per-call path).
    packed = jax.tree_util.tree_map(jax.block_until_ready,
                                    prepare_params(params))

    out = pose_adaptor_attn(hidden_states, pose_feature, packed)
    out = jax.block_until_ready(out)

    ref = reference(hidden_states, pose_feature, params)
    assert out.shape == (B, S, HIDDEN)
    # TODO(synk): pl.reciprocal(approx=True) normalization is ~12-bit accurate;
    # swap to approx=False if bit-tight parity with PyTorch is ever required.
    if not jnp.allclose(out, ref, atol=5e-3, rtol=5e-3):
        max_err = float(jnp.max(jnp.abs(out - ref)))
        raise AssertionError(f"kernel output mismatch, max abs err = {max_err}")

    print("KERNEL_OK")
</pallas_src>

<mosaic_0001>
module attributes {stable_mosaic.version = 11 : i64} {
  func.func @_pose_adaptor_attn_kernel(%arg0: memref<2x32x32xf32, #tpu.memory_space<vmem>>, %arg1: memref<32x96xf32, #tpu.memory_space<vmem>>, %arg2: memref<2x32x32xf32, #tpu.memory_space<vmem>>, %arg3: memref<2x32xf32, #tpu.memory_space<vmem>>, %arg4: memref<32x32xf32, #tpu.memory_space<vmem>>) attributes {dimension_semantics = [], scalar_prefetch = 0 : i64, scratch_operands = 0 : i64, tpu.core_type = #tpu.core_type<tc>} {
    %c0 = arith.constant 0 : index
    %c0_0 = arith.constant 0 : index
    %c0_1 = arith.constant 0 : index
    %0 = vector.load %arg0[%c0, %c0_0, %c0_1] : memref<2x32x32xf32, #tpu.memory_space<vmem>>, vector<1x32x32xf32>
    %1 = vector.shape_cast %0 : vector<1x32x32xf32> to vector<32x32xf32>
    %c1 = arith.constant 1 : index
    %c0_2 = arith.constant 0 : index
    %c0_3 = arith.constant 0 : index
    %2 = vector.load %arg0[%c1, %c0_2, %c0_3] : memref<2x32x32xf32, #tpu.memory_space<vmem>>, vector<1x32x32xf32>
    %3 = vector.shape_cast %2 : vector<1x32x32xf32> to vector<32x32xf32>
    %4 = arith.addf %1, %3 : vector<32x32xf32>
    %c0_4 = arith.constant 0 : index
    %c0_5 = arith.constant 0 : index
    %c0_6 = arith.constant 0 : index
    %5 = vector.load %arg2[%c0_4, %c0_5, %c0_6] : memref<2x32x32xf32, #tpu.memory_space<vmem>>, vector<1x32x32xf32>
    %6 = vector.shape_cast %5 : vector<1x32x32xf32> to vector<32x32xf32>
    %cst = arith.constant dense<0.000000e+00> : vector<32x32xf32>
    %7 = tpu.matmul %4, %6, %cst {dimension_numbers = #tpu.dot_dimension_numbers<[1], [0], [0], [1], [0, 0, 1, 1], [], []>} : vector<32x32xf32>, vector<32x32xf32>, vector<32x32xf32> -> vector<32x32xf32>
    %c0_7 = arith.constant 0 : index
    %c0_8 = arith.constant 0 : index
    %8 = vector.load %arg3[%c0_7, %c0_8] : memref<2x32xf32, #tpu.memory_space<vmem>>, vector<1x32xf32>
    %9 = vector.broadcast %8 : vector<1x32xf32> to vector<32x32xf32>
    %10 = arith.addf %7, %9 : vector<32x32xf32>
    %11 = arith.addf %10, %1 : vector<32x32xf32>
    %c0_9 = arith.constant 0 : index
    %c0_10 = arith.constant 0 : index
    %12 = vector.load %arg1[%c0_9, %c0_10] : memref<32x96xf32, #tpu.memory_space<vmem>>, vector<32x96xf32>
    %cst_11 = arith.constant dense<0.000000e+00> : vector<32x96xf32>
    %13 = tpu.matmul %11, %12, %cst_11 {dimension_numbers = #tpu.dot_dimension_numbers<[1], [0], [0], [1], [0, 0, 1, 1], [], []>} : vector<32x32xf32>, vector<32x96xf32>, vector<32x96xf32> -> vector<32x96xf32>
    %14 = vector.extract_strided_slice %13 {offsets = [0, 0], sizes = [32, 32], strides = [1, 1]} : vector<32x96xf32> to vector<32x32xf32>
    %15 = vector.extract_strided_slice %13 {offsets = [0, 32], sizes = [32, 32], strides = [1, 1]} : vector<32x96xf32> to vector<32x32xf32>
    %16 = vector.extract_strided_slice %13 {offsets = [0, 64], sizes = [32, 32], strides = [1, 1]} : vector<32x96xf32> to vector<32x32xf32>
    %17 = tpu.transpose %15, [1, 0] : vector<32x32xf32> -> vector<32x32xf32>
    %18 = vector.extract_strided_slice %14 {offsets = [0, 0], sizes = [16, 32], strides = [1, 1]} : vector<32x32xf32> to vector<16x32xf32>
    %19 = vector.extract_strided_slice %16 {offsets = [0, 0], sizes = [16, 32], strides = [1, 1]} : vector<32x32xf32> to vector<16x32xf32>
    %20 = vector.extract_strided_slice %17 {offsets = [0, 0], sizes = [32, 16], strides = [1, 1]} : vector<32x32xf32> to vector<32x16xf32>
    %21 = vector.extract_strided_slice %18 {offsets = [0, 0], sizes = [16, 8], strides = [1, 1]} : vector<16x32xf32> to vector<16x8xf32>
    %22 = vector.extract_strided_slice %20 {offsets = [0, 0], sizes = [8, 16], strides = [1, 1]} : vector<32x16xf32> to vector<8x16xf32>
    %cst_12 = arith.constant dense<0.000000e+00> : vector<16x16xf32>
    %23 = tpu.matmul %21, %22, %cst_12 {dimension_numbers = #tpu.dot_dimension_numbers<[1], [0], [0], [1], [0, 0, 1, 1], [], []>} : vector<16x8xf32>, vector<8x16xf32>, vector<16x16xf32> -> vector<16x16xf32>
    %cst_13 = arith.constant dense<0xFF800000> : vector<16xf32>
    %24 = vector.multi_reduction <maximumf>, %23, %cst_13 [1] : vector<16x16xf32> to vector<16xf32>
    %25 = vector.shape_cast %24 : vector<16xf32> to vector<16x1xf32>
    %26 = vector.broadcast %25 : vector<16x1xf32> to vector<16x16xf32>
    %27 = arith.subf %23, %26 : vector<16x16xf32>
    %28 = math.exp %27 : vector<16x16xf32>
    %cst_14 = arith.constant dense<0.000000e+00> : vector<16xf32>
    %29 = vector.multi_reduction <add>, %28, %cst_14 [1] : vector<16x16xf32> to vector<16xf32>
    %30 = vector.shape_cast %29 : vector<16xf32> to vector<16x1xf32>
    %31 = tpu.reciprocal %30 {approx = true} : vector<16x1xf32> -> vector<16x1xf32>
    %32 = vector.broadcast %31 : vector<16x1xf32> to vector<16x16xf32>
    %33 = arith.mulf %28, %32 : vector<16x16xf32>
    %34 = vector.extract_strided_slice %19 {offsets = [0, 0], sizes = [16, 8], strides = [1, 1]} : vector<16x32xf32> to vector<16x8xf32>
    %cst_15 = arith.constant dense<0.000000e+00> : vector<16x8xf32>
    %35 = tpu.matmul %33, %34, %cst_15 {dimension_numbers = #tpu.dot_dimension_numbers<[1], [0], [0], [1], [0, 0, 1, 1], [], []>} : vector<16x16xf32>, vector<16x8xf32>, vector<16x8xf32> -> vector<16x8xf32>
    %36 = vector.extract_strided_slice %18 {offsets = [0, 8], sizes = [16, 8], strides = [1, 1]} : vector<16x32xf32> to vector<16x8xf32>
    %37 = vector.extract_strided_slice %20 {offsets = [8, 0], sizes = [8, 16], strides = [1, 1]} : vector<32x16xf32> to vector<8x16xf32>
    %cst_16 = arith.constant dense<0.000000e+00> : vector<16x16xf32>
    %38 = tpu.matmul %36, %37, %cst_16 {dimension_numbers = #tpu.dot_dimension_numbers<[1], [0], [0], [1], [0, 0, 1, 1], [], []>} : vector<16x8xf32>, vector<8x16xf32>, vector<16x16xf32> -> vector<16x16xf32>
    %cst_17 = arith.constant dense<0xFF800000> : vector<16xf32>
    %39 = vector.multi_reduction <maximumf>, %38, %cst_17 [1] : vector<16x16xf32> to vector<16xf32>
    %40 = vector.shape_cast %39 : vector<16xf32> to vector<16x1xf32>
    %41 = vector.broadcast %40 : vector<16x1xf32> to vector<16x16xf32>
    %42 = arith.subf %38, %41 : vector<16x16xf32>
    %43 = math.exp %42 : vector<16x16xf32>
    %cst_18 = arith.constant dense<0.000000e+00> : vector<16xf32>
    %44 = vector.multi_reduction <add>, %43, %cst_18 [1] : vector<16x16xf32> to vector<16xf32>
    %45 = vector.shape_cast %44 : vector<16xf32> to vector<16x1xf32>
    %46 = tpu.reciprocal %45 {approx = true} : vector<16x1xf32> -> vector<16x1xf32>
    %47 = vector.broadcast %46 : vector<16x1xf32> to vector<16x16xf32>
    %48 = arith.mulf %43, %47 : vector<16x16xf32>
    %49 = vector.extract_strided_slice %19 {offsets = [0, 8], sizes = [16, 8], strides = [1, 1]} : vector<16x32xf32> to vector<16x8xf32>
    %cst_19 = arith.constant dense<0.000000e+00> : vector<16x8xf32>
    %50 = tpu.matmul %48, %49, %cst_19 {dimension_numbers = #tpu.dot_dimension_numbers<[1], [0], [0], [1], [0, 0, 1, 1], [], []>} : vector<16x16xf32>, vector<16x8xf32>, vector<16x8xf32> -> vector<16x8xf32>
    %51 = vector.extract_strided_slice %18 {offsets = [0, 16], sizes = [16, 8], strides = [1, 1]} : vector<16x32xf32> to vector<16x8xf32>
    %52 = vector.extract_strided_slice %20 {offsets = [16, 0], sizes = [8, 16], strides = [1, 1]} : vector<32x16xf32> to vector<8x16xf32>
    %cst_20 = arith.constant dense<0.000000e+00> : vector<16x16xf32>
    %53 = tpu.matmul %51, %52, %cst_20 {dimension_numbers = #tpu.dot_dimension_numbers<[1], [0], [0], [1], [0, 0, 1, 1], [], []>} : vector<16x8xf32>, vector<8x16xf32>, vector<16x16xf32> -> vector<16x16xf32>
    %cst_21 = arith.constant dense<0xFF800000> : vector<16xf32>
    %54 = vector.multi_reduction <maximumf>, %53, %cst_21 [1] : vector<16x16xf32> to vector<16xf32>
    %55 = vector.shape_cast %54 : vector<16xf32> to vector<16x1xf32>
    %56 = vector.broadcast %55 : vector<16x1xf32> to vector<16x16xf32>
    %57 = arith.subf %53, %56 : vector<16x16xf32>
    %58 = math.exp %57 : vector<16x16xf32>
    %cst_22 = arith.constant dense<0.000000e+00> : vector<16xf32>
    %59 = vector.multi_reduction <add>, %58, %cst_22 [1] : vector<16x16xf32> to vector<16xf32>
    %60 = vector.shape_cast %59 : vector<16xf32> to vector<16x1xf32>
    %61 = tpu.reciprocal %60 {approx = true} : vector<16x1xf32> -> vector<16x1xf32>
    %62 = vector.broadcast %61 : vector<16x1xf32> to vector<16x16xf32>
    %63 = arith.mulf %58, %62 : vector<16x16xf32>
    %64 = vector.extract_strided_slice %19 {offsets = [0, 16], sizes = [16, 8], strides = [1, 1]} : vector<16x32xf32> to vector<16x8xf32>
    %cst_23 = arith.constant dense<0.000000e+00> : vector<16x8xf32>
    %65 = tpu.matmul %63, %64, %cst_23 {dimension_numbers = #tpu.dot_dimension_numbers<[1], [0], [0], [1], [0, 0, 1, 1], [], []>} : vector<16x16xf32>, vector<16x8xf32>, vector<16x8xf32> -> vector<16x8xf32>
    %66 = vector.extract_strided_slice %18 {offsets = [0, 24], sizes = [16, 8], strides = [1, 1]} : vector<16x32xf32> to vector<16x8xf32>
    %67 = vector.extract_strided_slice %20 {offsets = [24, 0], sizes = [8, 16], strides = [1, 1]} : vector<32x16xf32> to vector<8x16xf32>
    %cst_24 = arith.constant dense<0.000000e+00> : vector<16x16xf32>
    %68 = tpu.matmul %66, %67, %cst_24 {dimension_numbers = #tpu.dot_dimension_numbers<[1], [0], [0], [1], [0, 0, 1, 1], [], []>} : vector<16x8xf32>, vector<8x16xf32>, vector<16x16xf32> -> vector<16x16xf32>
    %cst_25 = arith.constant dense<0xFF800000> : vector<16xf32>
    %69 = vector.multi_reduction <maximumf>, %68, %cst_25 [1] : vector<16x16xf32> to vector<16xf32>
    %70 = vector.shape_cast %69 : vector<16xf32> to vector<16x1xf32>
    %71 = vector.broadcast %70 : vector<16x1xf32> to vector<16x16xf32>
    %72 = arith.subf %68, %71 : vector<16x16xf32>
    %73 = math.exp %72 : vector<16x16xf32>
    %cst_26 = arith.constant dense<0.000000e+00> : vector<16xf32>
    %74 = vector.multi_reduction <add>, %73, %cst_26 [1] : vector<16x16xf32> to vector<16xf32>
    %75 = vector.shape_cast %74 : vector<16xf32> to vector<16x1xf32>
    %76 = tpu.reciprocal %75 {approx = true} : vector<16x1xf32> -> vector<16x1xf32>
    %77 = vector.broadcast %76 : vector<16x1xf32> to vector<16x16xf32>
    %78 = arith.mulf %73, %77 : vector<16x16xf32>
    %79 = vector.extract_strided_slice %19 {offsets = [0, 24], sizes = [16, 8], strides = [1, 1]} : vector<16x32xf32> to vector<16x8xf32>
    %cst_27 = arith.constant dense<0.000000e+00> : vector<16x8xf32>
    %80 = tpu.matmul %78, %79, %cst_27 {dimension_numbers = #tpu.dot_dimension_numbers<[1], [0], [0], [1], [0, 0, 1, 1], [], []>} : vector<16x16xf32>, vector<16x8xf32>, vector<16x8xf32> -> vector<16x8xf32>
    %81 = tpu.concatenate %35, %50, %65, %80 in 1 : vector<16x8xf32>, vector<16x8xf32>, vector<16x8xf32>, vector<16x8xf32> -> vector<16x32xf32>
    %82 = vector.extract_strided_slice %14 {offsets = [16, 0], sizes = [16, 32], strides = [1, 1]} : vector<32x32xf32> to vector<16x32xf32>
    %83 = vector.extract_strided_slice %16 {offsets = [16, 0], sizes = [16, 32], strides = [1, 1]} : vector<32x32xf32> to vector<16x32xf32>
    %84 = vector.extract_strided_slice %17 {offsets = [0, 16], sizes = [32, 16], strides = [1, 1]} : vector<32x32xf32> to vector<32x16xf32>
    %85 = vector.extract_strided_slice %82 {offsets = [0, 0], sizes = [16, 8], strides = [1, 1]} : vector<16x32xf32> to vector<16x8xf32>
    %86 = vector.extract_strided_slice %84 {offsets = [0, 0], sizes = [8, 16], strides = [1, 1]} : vector<32x16xf32> to vector<8x16xf32>
    %cst_28 = arith.constant dense<0.000000e+00> : vector<16x16xf32>
    %87 = tpu.matmul %85, %86, %cst_28 {dimension_numbers = #tpu.dot_dimension_numbers<[1], [0], [0], [1], [0, 0, 1, 1], [], []>} : vector<16x8xf32>, vector<8x16xf32>, vector<16x16xf32> -> vector<16x16xf32>
    %cst_29 = arith.constant dense<0xFF800000> : vector<16xf32>
    %88 = vector.multi_reduction <maximumf>, %87, %cst_29 [1] : vector<16x16xf32> to vector<16xf32>
    %89 = vector.shape_cast %88 : vector<16xf32> to vector<16x1xf32>
    %90 = vector.broadcast %89 : vector<16x1xf32> to vector<16x16xf32>
    %91 = arith.subf %87, %90 : vector<16x16xf32>
    %92 = math.exp %91 : vector<16x16xf32>
    %cst_30 = arith.constant dense<0.000000e+00> : vector<16xf32>
    %93 = vector.multi_reduction <add>, %92, %cst_30 [1] : vector<16x16xf32> to vector<16xf32>
    %94 = vector.shape_cast %93 : vector<16xf32> to vector<16x1xf32>
    %95 = tpu.reciprocal %94 {approx = true} : vector<16x1xf32> -> vector<16x1xf32>
    %96 = vector.broadcast %95 : vector<16x1xf32> to vector<16x16xf32>
    %97 = arith.mulf %92, %96 : vector<16x16xf32>
    %98 = vector.extract_strided_slice %83 {offsets = [0, 0], sizes = [16, 8], strides = [1, 1]} : vector<16x32xf32> to vector<16x8xf32>
    %cst_31 = arith.constant dense<0.000000e+00> : vector<16x8xf32>
    %99 = tpu.matmul %97, %98, %cst_31 {dimension_numbers = #tpu.dot_dimension_numbers<[1], [0], [0], [1], [0, 0, 1, 1], [], []>} : vector<16x16xf32>, vector<16x8xf32>, vector<16x8xf32> -> vector<16x8xf32>
    %100 = vector.extract_strided_slice %82 {offsets = [0, 8], sizes = [16, 8], strides = [1, 1]} : vector<16x32xf32> to vector<16x8xf32>
    %101 = vector.extract_strided_slice %84 {offsets = [8, 0], sizes = [8, 16], strides = [1, 1]} : vector<32x16xf32> to vector<8x16xf32>
    %cst_32 = arith.constant dense<0.000000e+00> : vector<16x16xf32>
    %102 = tpu.matmul %100, %101, %cst_32 {dimension_numbers = #tpu.dot_dimension_numbers<[1], [0], [0], [1], [0, 0, 1, 1], [], []>} : vector<16x8xf32>, vector<8x16xf32>, vector<16x16xf32> -> vector<16x16xf32>
    %cst_33 = arith.constant dense<0xFF800000> : vector<16xf32>
    %103 = vector.multi_reduction <maximumf>, %102, %cst_33 [1] : vector<16x16xf32> to vector<16xf32>
    %104 = vector.shape_cast %103 : vector<16xf32> to vector<16x1xf32>
    %105 = vector.broadcast %104 : vector<16x1xf32> to vector<16x16xf32>
    %106 = arith.subf %102, %105 : vector<16x16xf32>
    %107 = math.exp %106 : vector<16x16xf32>
    %cst_34 = arith.constant dense<0.000000e+00> : vector<16xf32>
    %108 = vector.multi_reduction <add>, %107, %cst_34 [1] : vector<16x16xf32> to vector<16xf32>
    %109 = vector.shape_cast %108 : vector<16xf32> to vector<16x1xf32>
    %110 = tpu.reciprocal %109 {approx = true} : vector<16x1xf32> -> vector<16x1xf32>
    %111 = vector.broadcast %110 : vector<16x1xf32> to vector<16x16xf32>
    %112 = arith.mulf %107, %111 : vector<16x16xf32>
    %113 = vector.extract_strided_slice %83 {offsets = [0, 8], sizes = [16, 8], strides = [1, 1]} : vector<16x32xf32> to vector<16x8xf32>
    %cst_35 = arith.constant dense<0.000000e+00> : vector<16x8xf32>
    %114 = tpu.matmul %112, %113, %cst_35 {dimension_numbers = #tpu.dot_dimension_numbers<[1], [0], [0], [1], [0, 0, 1, 1], [], []>} : vector<16x16xf32>, vector<16x8xf32>, vector<16x8xf32> -> vector<16x8xf32>
    %115 = vector.extract_strided_slice %82 {offsets = [0, 16], sizes = [16, 8], strides = [1, 1]} : vector<16x32xf32> to vector<16x8xf32>
    %116 = vector.extract_strided_slice %84 {offsets = [16, 0], sizes = [8, 16], strides = [1, 1]} : vector<32x16xf32> to vector<8x16xf32>
    %cst_36 = arith.constant dense<0.000000e+00> : vector<16x16xf32>
    %117 = tpu.matmul %115, %116, %cst_36 {dimension_numbers = #tpu.dot_dimension_numbers<[1], [0], [0], [1], [0, 0, 1, 1], [], []>} : vector<16x8xf32>, vector<8x16xf32>, vector<16x16xf32> -> vector<16x16xf32>
    %cst_37 = arith.constant dense<0xFF800000> : vector<16xf32>
    %118 = vector.multi_reduction <maximumf>, %117, %cst_37 [1] : vector<16x16xf32> to vector<16xf32>
    %119 = vector.shape_cast %118 : vector<16xf32> to vector<16x1xf32>
    %120 = vector.broadcast %119 : vector<16x1xf32> to vector<16x16xf32>
    %121 = arith.subf %117, %120 : vector<16x16xf32>
    %122 = math.exp %121 : vector<16x16xf32>
    %cst_38 = arith.constant dense<0.000000e+00> : vector<16xf32>
    %123 = vector.multi_reduction <add>, %122, %cst_38 [1] : vector<16x16xf32> to vector<16xf32>
    %124 = vector.shape_cast %123 : vector<16xf32> to vector<16x1xf32>
    %125 = tpu.reciprocal %124 {approx = true} : vector<16x1xf32> -> vector<16x1xf32>
    %126 = vector.broadcast %125 : vector<16x1xf32> to vector<16x16xf32>
    %127 = arith.mulf %122, %126 : vector<16x16xf32>
    %128 = vector.extract_strided_slice %83 {offsets = [0, 16], sizes = [16, 8], strides = [1, 1]} : vector<16x32xf32> to vector<16x8xf32>
    %cst_39 = arith.constant dense<0.000000e+00> : vector<16x8xf32>
    %129 = tpu.matmul %127, %128, %cst_39 {dimension_numbers = #tpu.dot_dimension_numbers<[1], [0], [0], [1], [0, 0, 1, 1], [], []>} : vector<16x16xf32>, vector<16x8xf32>, vector<16x8xf32> -> vector<16x8xf32>
    %130 = vector.extract_strided_slice %82 {offsets = [0, 24], sizes = [16, 8], strides = [1, 1]} : vector<16x32xf32> to vector<16x8xf32>
    %131 = vector.extract_strided_slice %84 {offsets = [24, 0], sizes = [8, 16], strides = [1, 1]} : vector<32x16xf32> to vector<8x16xf32>
    %cst_40 = arith.constant dense<0.000000e+00> : vector<16x16xf32>
    %132 = tpu.matmul %130, %131, %cst_40 {dimension_numbers = #tpu.dot_dimension_numbers<[1], [0], [0], [1], [0, 0, 1, 1], [], []>} : vector<16x8xf32>, vector<8x16xf32>, vector<16x16xf32> -> vector<16x16xf32>
    %cst_41 = arith.constant dense<0xFF800000> : vector<16xf32>
    %133 = vector.multi_reduction <maximumf>, %132, %cst_41 [1] : vector<16x16xf32> to vector<16xf32>
    %134 = vector.shape_cast %133 : vector<16xf32> to vector<16x1xf32>
    %135 = vector.broadcast %134 : vector<16x1xf32> to vector<16x16xf32>
    %136 = arith.subf %132, %135 : vector<16x16xf32>
    %137 = math.exp %136 : vector<16x16xf32>
    %cst_42 = arith.constant dense<0.000000e+00> : vector<16xf32>
    %138 = vector.multi_reduction <add>, %137, %cst_42 [1] : vector<16x16xf32> to vector<16xf32>
    %139 = vector.shape_cast %138 : vector<16xf32> to vector<16x1xf32>
    %140 = tpu.reciprocal %139 {approx = true} : vector<16x1xf32> -> vector<16x1xf32>
    %141 = vector.broadcast %140 : vector<16x1xf32> to vector<16x16xf32>
    %142 = arith.mulf %137, %141 : vector<16x16xf32>
    %143 = vector.extract_strided_slice %83 {offsets = [0, 24], sizes = [16, 8], strides = [1, 1]} : vector<16x32xf32> to vector<16x8xf32>
    %cst_43 = arith.constant dense<0.000000e+00> : vector<16x8xf32>
    %144 = tpu.matmul %142, %143, %cst_43 {dimension_numbers = #tpu.dot_dimension_numbers<[1], [0], [0], [1], [0, 0, 1, 1], [], []>} : vector<16x16xf32>, vector<16x8xf32>, vector<16x8xf32> -> vector<16x8xf32>
    %145 = tpu.concatenate %99, %114, %129, %144 in 1 : vector<16x8xf32>, vector<16x8xf32>, vector<16x8xf32>, vector<16x8xf32> -> vector<16x32xf32>
    %146 = tpu.concatenate %81, %145 in 0 : vector<16x32xf32>, vector<16x32xf32> -> vector<32x32xf32>
    %c1_44 = arith.constant 1 : index
    %c0_45 = arith.constant 0 : index
    %c0_46 = arith.constant 0 : index
    %147 = vector.load %arg2[%c1_44, %c0_45, %c0_46] : memref<2x32x32xf32, #tpu.memory_space<vmem>>, vector<1x32x32xf32>
    %148 = vector.shape_cast %147 : vector<1x32x32xf32> to vector<32x32xf32>
    %cst_47 = arith.constant dense<0.000000e+00> : vector<32x32xf32>
    %149 = tpu.matmul %146, %148, %cst_47 {dimension_numbers = #tpu.dot_dimension_numbers<[1], [0], [0], [1], [0, 0, 1, 1], [], []>} : vector<32x32xf32>, vector<32x32xf32>, vector<32x32xf32> -> vector<32x32xf32>
    %c1_48 = arith.constant 1 : index
    %c0_49 = arith.constant 0 : index
    %150 = vector.load %arg3[%c1_48, %c0_49] : memref<2x32xf32, #tpu.memory_space<vmem>>, vector<1x32xf32>
    %151 = vector.broadcast %150 : vector<1x32xf32> to vector<32x32xf32>
    %152 = arith.addf %149, %151 : vector<32x32xf32>
    %153 = arith.addf %152, %1 : vector<32x32xf32>
    %c0_50 = arith.constant 0 : index
    %c0_51 = arith.constant 0 : index
    %154 = vector.load %arg4[%c0_50, %c0_51] : memref<32x32xf32, #tpu.memory_space<vmem>>, vector<32x32xf32>
    tpu.vector_store %arg4[%c0_50, %c0_51], %153 {strides = array<i32>} : memref<32x32xf32, #tpu.memory_space<vmem>>, vector<32x32xf32>,
    return
  }
}

</mosaic_0001>

<llo_original>
// kernel: tpu_custom_call.1
$region0: #{tpu_custom_call.1}
  #allocation0 [shape = 'u32[]', space=smem, size = 0x4, offset = 0x4, fixed_abs, tag = 'smem constant byte address 0x4 - core index']
  #allocation1 [shape = 'u32[72,128]{1,0:T(1,128)}', space=vmem, size = 0x9000, scoped, tag = 'internal scratch']
  %s0 = inlined_call_operand.hbm [shape: f32[2,32,32], index: 0, kind: input, shape index: {}]
  %s1 = inlined_call_operand.hbm [shape: f32[32,96], index: 1, kind: input, shape index: {}]
  %s2 = inlined_call_operand.hbm [shape: f32[2,32,32], index: 2, kind: input, shape index: {}]
  %s3 = inlined_call_operand.vmem [shape: f32[2,32], index: 3, kind: input, shape index: {}]
  %s4 = inlined_call_operand.hbm [shape: f32[32,32], index: 4, kind: output, shape index: {}]
  %s5 = sld [smem:[#allocation0]]
  $region38: #{tpu_custom_call.1} parent=0
    _
  %s7 = ssub.s32 1, %s5
  %s8 = scalar_select 0, %s7, %s5
  $region1: #{tpu_custom_call.1} parent=0
    #allocation2 [shape = 'u8[32768]{0}', space=vmem, size = 0x8000, scoped, tag = 'input window, operand 0, single buffered']
    #allocation3 [shape = 's32[1]{0}', space=sflag, size = 0x4, scoped, tag = 'scoped memory for tpu_custom_call.1']
    #allocation4 [shape = 's32[1]{0}', space=sflag, size = 0x4, scoped, tag = 'scoped memory for tpu_custom_call.1']
    #allocation5 [shape = 'u8[16384]{0}', space=vmem, size = 0x4000, scoped, tag = 'input window, operand 1, single buffered']
    #allocation6 [shape = 's32[1]{0}', space=sflag, size = 0x4, scoped, tag = 'scoped memory for tpu_custom_call.1']
    #allocation7 [shape = 'u8[32768]{0}', space=vmem, size = 0x8000, scoped, tag = 'input window, operand 2, single buffered']
    #allocation8 [shape = 'u8[16384]{0}', space=vmem, size = 0x4000, scoped, tag = 'output window, operand 0, single buffered']
    %9 = vsyncpa [#allocation3], 0
    %10 = vsyncpa [#allocation6], 0
    %11 = vsyncpa [#allocation4], 0
    // Predicated region
    $region2: #{tpu_custom_call.1} parent=1 // pred_check
      _
    $region3: #{tpu_custom_call.1} parent=1 // pred_check_branch
      %13 = sbr.rel (0) target = $region5
    $region4: #{tpu_custom_call.1} parent=1 // pred_region
      %15 = vsyncadd [#allocation3], 0
      %s16 = sshll.u32 %s0, 4
      %s17 = int_to_ptr.hbm [resolvable:$true] %s16
      %s18 = sshll.u32 [#allocation2], 4
      %s19 = int_to_ptr.vmem [resolvable:$true] %s18
      %24 = dma.hbm_to_vmem [thread:$0]  %s17, 1024, %s19, [#allocation3], 128, 128, 8
    $region5: #{tpu_custom_call.1} parent=1 // pred_fallthru
      _
    // Predicated region
    $region6: #{tpu_custom_call.1} parent=1 // pred_check
      _
    $region7: #{tpu_custom_call.1} parent=1 // pred_check_branch
      %26 = sbr.rel (0) target = $region9
    $region8: #{tpu_custom_call.1} parent=1 // pred_region
      %28 = vsyncadd [#allocation6], 0
      %s29 = sshll.u32 %s1, 4
      %s30 = int_to_ptr.hbm [resolvable:$true] %s29
      %s31 = sshll.u32 [#allocation5], 4
      %s32 = int_to_ptr.vmem [resolvable:$true] %s31
      %37 = dma.hbm_to_vmem [thread:$0]  %s30, 512, %s32, [#allocation6], 128, 128, 8
    $region9: #{tpu_custom_call.1} parent=1 // pred_fallthru
      _
    // Predicated region
    $region10: #{tpu_custom_call.1} parent=1 // pred_check
      _
    $region11: #{tpu_custom_call.1} parent=1 // pred_check_branch
      %39 = sbr.rel (0) target = $region13
    $region12: #{tpu_custom_call.1} parent=1 // pred_region
      %41 = vsyncadd [#allocation6], 0
      %s42 = sshll.u32 %s2, 4
      %s43 = int_to_ptr.hbm [resolvable:$true] %s42
      %s44 = sshll.u32 [#allocation7], 4
      %s45 = int_to_ptr.vmem [resolvable:$true] %s44
      %50 = dma.hbm_to_vmem [thread:$0]  %s43, 1024, %s45, [#allocation6], 128, 128, 8
    $region13: #{tpu_custom_call.1} parent=1 // pred_fallthru
      _
    // Predicated region
    $region14: #{tpu_custom_call.1} parent=1 // pred_check
      _
    $region15: #{tpu_custom_call.1} parent=1 // pred_check_branch
      %52 = sbr.rel (0) target = $region17
    $region16: #{tpu_custom_call.1} parent=1 // pred_region
      _
    $region17: #{tpu_custom_call.1} parent=1 // pred_fallthru
      _
    // Predicated region
    $region18: #{tpu_custom_call.1} parent=1 // pred_check
      _
    $region19: #{tpu_custom_call.1} parent=1 // pred_check_branch
      %54 = sbr.rel (0) target = $region21
    $region20: #{tpu_custom_call.1} parent=1 // pred_region
      %56 = dma.done [#allocation3], 1024
    $region21: #{tpu_custom_call.1} parent=1 // pred_fallthru
      _
    // Predicated region
    $region22: #{tpu_custom_call.1} parent=1 // pred_check
      _
    $region23: #{tpu_custom_call.1} parent=1 // pred_check_branch
      %58 = sbr.rel (0) target = $region25
    $region24: #{tpu_custom_call.1} parent=1 // pred_region
      %60 = dma.done [#allocation6], 512
    $region25: #{tpu_custom_call.1} parent=1 // pred_fallthru
      _
    // Predicated region
    $region26: #{tpu_custom_call.1} parent=1 // pred_check
      _
    $region27: #{tpu_custom_call.1} parent=1 // pred_check_branch
      %62 = sbr.rel (0) target = $region29
    $region28: #{tpu_custom_call.1} parent=1 // pred_region
      %64 = dma.done [#allocation6], 1024
    $region29: #{tpu_custom_call.1} parent=1 // pred_fallthru
      _
    %v65 = vld [vmem:[#allocation2] sm:$0xff]
    %v66 = vld [vmem:[#allocation2 + $0x8] sm:$0xff]
    %v67 = vld [vmem:[#allocation2 + $0x10] sm:$0xff]
    %v68 = vld [vmem:[#allocation2 + $0x18] sm:$0xff]
    %s69 = scalar_lea.vmem [#allocation2], 32
    %v70 = vld [vmem:[%s69] sm:$0xff]
    %v71 = vld [vmem:[%s69 + $0x8] sm:$0xff]
    %v72 = vld [vmem:[%s69 + $0x10] sm:$0xff]
    %v73 = vld [vmem:[%s69 + $0x18] sm:$0xff]
    %v74 = vadd.f32 %v65, %v70
    %v75 = vadd.f32 %v66, %v71
    %v76 = vadd.f32 %v67, %v72
    %v77 = vadd.f32 %v68, %v73
    %v78 = vld [vmem:[#allocation7] sm:$0xff]
    %v79 = vld [vmem:[#allocation7 + $0x8] sm:$0xff]
    %v80 = vld [vmem:[#allocation7 + $0x10] sm:$0xff]
    %v81 = vld [vmem:[#allocation7 + $0x18] sm:$0xff]
    %v82 = vld [vmem:[%s3] sm:$0x1]
    %v83 = vperm.slane %v82, 0
    %vm84 = vcmask 261120
    %v86 = vsel %vm84, %v74, 0
    %v89 = vsel %vm84, %v75, 0
    %v92 = vsel %vm84, %v76, 0
    %v95 = vsel %vm84, %v77, 0
    %97 = vmatpush.msra.mxu0 0.0
    %98 = vmatpush.msra.mxu0 0.0
    %99 = vmatpush.msra.mxu0 0.0
    %100 = vmatpush.msra.mxu0 0.0
    %101 = vmatpush.msra.mxu0 0.0
    %102 = vmatpush.msra.mxu0 0.0
    %103 = vmatpush.msra.mxu0 0.0
    %104 = vmatpush.msra.mxu0 0.0
    %105 = vmatpush.msra.mxu0 0.0
    %106 = vmatpush.msra.mxu0 0.0
    %107 = vmatpush.msra.mxu0 0.0
    %108 = vmatpush.msra.mxu0 0.0
    %109 = vmatpush.msra.mxu0 %v81
    %110 = vmatpush.msra.mxu0 %v80
    %111 = vmatpush.msra.mxu0 %v79
    %112 = vmatpush.msra.mxu0 %v78
    %113 = vmatmul.f32.gmra.mxu0 %v86
    %v114 = vpop.f32.mrf.mxu0
    %v115 = vadd.f32 %v83, %v114
    %116 = vmatmul.f32.gmra.mxu0 %v89
    %v117 = vpop.f32.mrf.mxu0
    %v118 = vadd.f32 %v83, %v117
    %119 = vmatmul.f32.gmra.mxu0 %v92
    %v120 = vpop.f32.mrf.mxu0
    %v121 = vadd.f32 %v83, %v120
    %122 = vmatmul.f32.gmra.mxu0 %v95
    %v123 = vpop.f32.mrf.mxu0
    %v124 = vadd.f32 %v83, %v123
    %125 = vdwg.mxu0
    %v126 = vadd.f32 %v115, %v65
    %v127 = vadd.f32 %v118, %v66
    %v128 = vadd.f32 %v121, %v67
    %v129 = vadd.f32 %v124, %v68
    %v130 = vld [vmem:[#allocation5] sm:$0xff]
    %v131 = vld [vmem:[#allocation5 + $0x8] sm:$0xff]
    %v132 = vld [vmem:[#allocation5 + $0x10] sm:$0xff]
    %v133 = vld [vmem:[#allocation5 + $0x18] sm:$0xff]
    %v135 = vsel %vm84, %v126, 0
    %v138 = vsel %vm84, %v127, 0
    %v141 = vsel %vm84, %v128, 0
    %v144 = vsel %vm84, %v129, 0
    %146 = vmatpush.msra.mxu0 0.0
    %147 = vmatpush.msra.mxu0 0.0
    %148 = vmatpush.msra.mxu0 0.0
    %149 = vmatpush.msra.mxu0 0.0
    %150 = vmatpush.msra.mxu0 0.0
    %151 = vmatpush.msra.mxu0 0.0
    %152 = vmatpush.msra.mxu0 0.0
    %153 = vmatpush.msra.mxu0 0.0
    %154 = vmatpush.msra.mxu0 0.0
    %155 = vmatpush.msra.mxu0 0.0
    %156 = vmatpush.msra.mxu0 0.0
    %157 = vmatpush.msra.mxu0 0.0
    %158 = vmatpush.msra.mxu0 %v133
    %159 = vmatpush.msra.mxu0 %v132
    %160 = vmatpush.msra.mxu0 %v131
    %161 = vmatpush.msra.mxu0 %v130
    %162 = vmatmul.f32.gmra.mxu0 %v135
    %v163 = vpop.f32.mrf.mxu0
    %v164 = vadd.f32 0.0, %v163
    %165 = vmatmul.f32.gmra.mxu0 %v138
    %v166 = vpop.f32.mrf.mxu0
    %v167 = vadd.f32 0.0, %v166
    %168 = vmatmul.f32.gmra.mxu0 %v141
    %v169 = vpop.f32.mrf.mxu0
    %v170 = vadd.f32 0.0, %v169
    %171 = vmatmul.f32.gmra.mxu0 %v144
    %v172 = vpop.f32.mrf.mxu0
    %v173 = vadd.f32 0.0, %v172
    %174 = vdwg.mxu0
    %177 = vrot.lane.b32.xlu0 %v164, 96
    %v178 = vpop.permute.xlu0 %177
    %179 = vrot.lane.b32.xlu0 %v167, 96
    %v180 = vpop.permute.xlu0 %179
    %vm181 = vcmask 64512
    %v182 = vsel %vm181, %v164, 0
    %v184 = vsel %vm181, %v167, 0
    %v186 = vsel %vm181, %v178, 0
    %v188 = vsel %vm181, %v180, 0
    %190 = vmatpush.xpose.msra.mxu0 0.0
    %191 = vmatpush.xpose.msra.mxu0 0.0
    %192 = vmatpush.xpose.msra.mxu0 0.0
    %193 = vmatpush.xpose.msra.mxu0 0.0
    %194 = vmatpush.xpose.msra.mxu0 0.0
    %195 = vmatpush.xpose.msra.mxu0 0.0
    %196 = vmatpush.xpose.msra.mxu0 0.0
    %197 = vmatpush.xpose.msra.mxu0 0.0
    %198 = vmatpush.xpose.msra.mxu0 0.0
    %199 = vmatpush.xpose.msra.mxu0 0.0
    %200 = vmatpush.xpose.msra.mxu0 0.0
    %201 = vmatpush.xpose.msra.mxu0 0.0
    %202 = vmatpush.xpose.msra.mxu0 0.0
    %203 = vmatpush.xpose.msra.mxu0 0.0
    %204 = vmatpush.xpose.msra.mxu0 %v188
    %205 = vmatpush.xpose.msra.mxu0 %v186
    %206 = vmatmul.f32.gmra.mxu0 %v182
    %v207 = vpop.f32.mrf.mxu0
    %v208 = vadd.f32 0.0, %v207
    %209 = vmatmul.f32.gmra.mxu0 %v184
    %v210 = vpop.f32.mrf.mxu0
    %v211 = vadd.f32 0.0, %v210
    %212 = vdwg.mxu0
    %vm213 = vcmask 130048
    %v214 = vsel %vm213, %v208, -inf
    %215 = vmax.xlane.f32.xlu0 %v214
    %v216 = vpop.xlane.xlu0 %215
    %v217 = vsel %vm213, %v211, -inf
    %218 = vmax.xlane.f32.xlu0 %v217
    %v219 = vpop.xlane.xlu0 %218
    %v220 = vsub.f32 %v208, %v216
    %v221 = vsub.f32 %v211, %v219
    %v222 = vmul.f32 %v220, 1.442695
    %v223 = vpow.pop %v222
    %v224 = vmul.f32 %v221, 1.442695
    %v225 = vpow.pop %v224
    %v226 = vsel %vm213, %v223, 0.0
    %227 = vadd.xlane.f32.xlu0 %v226
    %v228 = vpop.xlane.xlu0 %227
    %v229 = vsel %vm213, %v225, 0.0
    %230 = vadd.xlane.f32.xlu0 %v229
    %v231 = vpop.xlane.xlu0 %230
    %v232 = vrcp.pop %v228
    %v233 = vrcp.pop %v231
    %v234 = vmul.f32 %v223, %v232
    %v235 = vmul.f32 %v225, %v233
    %236 = vrot.lane.b32.xlu0 %v164, 64
    %v237 = vpop.permute.xlu0 %236
    %238 = vrot.lane.b32.xlu0 %v167, 64
    %v239 = vpop.permute.xlu0 %238
    %v243 = vsel %vm213, %v234, 0
    %v246 = vsel %vm213, %v235, 0
    %248 = vmatpush.msra.mxu0 0.0
    %249 = vmatpush.msra.mxu0 0.0
    %250 = vmatpush.msra.mxu0 0.0
    %251 = vmatpush.msra.mxu0 0.0
    %252 = vmatpush.msra.mxu0 0.0
    %253 = vmatpush.msra.mxu0 0.0
    %254 = vmatpush.msra.mxu0 0.0
    %255 = vmatpush.msra.mxu0 0.0
    %256 = vmatpush.msra.mxu0 0.0
    %257 = vmatpush.msra.mxu0 0.0
    %258 = vmatpush.msra.mxu0 0.0
    %259 = vmatpush.msra.mxu0 0.0
    %260 = vmatpush.msra.mxu0 0.0
    %261 = vmatpush.msra.mxu0 0.0
    %262 = vmatpush.msra.mxu0 %v239
    %263 = vmatpush.msra.mxu0 %v237
    %264 = vmatmul.f32.gmra.mxu0 %v243
    %v265 = vpop.f32.mrf.mxu0
    %v266 = vadd.f32 0.0, %v265
    %267 = vmatmul.f32.gmra.mxu0 %v246
    %v268 = vpop.f32.mrf.mxu0
    %v269 = vadd.f32 0.0, %v268
    %270 = vdwg.mxu0
    %271 = vrot.lane.b32.xlu0 %v164, 120
    %v272 = vpop.permute.xlu0 %271
    %273 = vrot.lane.b32.xlu0 %v167, 120
    %v274 = vpop.permute.xlu0 %273
    %275 = vrot.lane.b32.xlu0 %v164, 88
    %v276 = vpop.permute.xlu0 %275
    %277 = vrot.lane.b32.xlu0 %v167, 88
    %v278 = vpop.permute.xlu0 %277
    %v279 = vsel %vm181, %v272, 0
    %v281 = vsel %vm181, %v274, 0
    %v283 = vsel %vm181, %v276, 0
    %v285 = vsel %vm181, %v278, 0
    %287 = vmatpush.xpose.msra.mxu0 0.0
    %288 = vmatpush.xpose.msra.mxu0 0.0
    %289 = vmatpush.xpose.msra.mxu0 0.0
    %290 = vmatpush.xpose.msra.mxu0 0.0
    %291 = vmatpush.xpose.msra.mxu0 0.0
    %292 = vmatpush.xpose.msra.mxu0 0.0
    %293 = vmatpush.xpose.msra.mxu0 0.0
    %294 = vmatpush.xpose.msra.mxu0 0.0
    %295 = vmatpush.xpose.msra.mxu0 0.0
    %296 = vmatpush.xpose.msra.mxu0 0.0
    %297 = vmatpush.xpose.msra.mxu0 0.0
    %298 = vmatpush.xpose.msra.mxu0 0.0
    %299 = vmatpush.xpose.msra.mxu0 0.0
    %300 = vmatpush.xpose.msra.mxu0 0.0
    %301 = vmatpush.xpose.msra.mxu0 %v285
    %302 = vmatpush.xpose.msra.mxu0 %v283
    %303 = vmatmul.f32.gmra.mxu0 %v279
    %v304 = vpop.f32.mrf.mxu0
    %v305 = vadd.f32 0.0, %v304
    %306 = vmatmul.f32.gmra.mxu0 %v281
    %v307 = vpop.f32.mrf.mxu0
    %v308 = vadd.f32 0.0, %v307
    %309 = vdwg.mxu0
    %v310 = vsel %vm213, %v305, -inf
    %311 = vmax.xlane.f32.xlu0 %v310
    %v312 = vpop.xlane.xlu0 %311
    %v313 = vsel %vm213, %v308, -inf
    %314 = vmax.xlane.f32.xlu0 %v313
    %v315 = vpop.xlane.xlu0 %314
    %v316 = vsub.f32 %v305, %v312
    %v317 = vsub.f32 %v308, %v315
    %v318 = vmul.f32 %v316, 1.442695
    %v319 = vpow.pop %v318
    %v320 = vmul.f32 %v317, 1.442695
    %v321 = vpow.pop %v320
    %v322 = vsel %vm213, %v319, 0.0
    %323 = vadd.xlane.f32.xlu0 %v322
    %v324 = vpop.xlane.xlu0 %323
    %v325 = vsel %vm213, %v321, 0.0
    %326 = vadd.xlane.f32.xlu0 %v325
    %v327 = vpop.xlane.xlu0 %326
    %v328 = vrcp.pop %v324
    %v329 = vrcp.pop %v327
    %v330 = vmul.f32 %v319, %v328
    %v331 = vmul.f32 %v321, %v329
    %332 = vrot.lane.b32.xlu0 %v164, 56
    %v333 = vpop.permute.xlu0 %332
    %334 = vrot.lane.b32.xlu0 %v167, 56
    %v335 = vpop.permute.xlu0 %334
    %v339 = vsel %vm213, %v330, 0
    %v342 = vsel %vm213, %v331, 0
    %344 = vmatpush.msra.mxu0 0.0
    %345 = vmatpush.msra.mxu0 0.0
    %346 = vmatpush.msra.mxu0 0.0
    %347 = vmatpush.msra.mxu0 0.0
    %348 = vmatpush.msra.mxu0 0.0
    %349 = vmatpush.msra.mxu0 0.0
    %350 = vmatpush.msra.mxu0 0.0
    %351 = vmatpush.msra.mxu0 0.0
    %352 = vmatpush.msra.mxu0 0.0
    %353 = vmatpush.msra.mxu0 0.0
    %354 = vmatpush.msra.mxu0 0.0
    %355 = vmatpush.msra.mxu0 0.0
    %356 = vmatpush.msra.mxu0 0.0
    %357 = vmatpush.msra.mxu0 0.0
    %358 = vmatpush.msra.mxu0 %v335
    %359 = vmatpush.msra.mxu0 %v333
    %360 = vmatmul.f32.gmra.mxu0 %v339
    %v361 = vpop.f32.mrf.mxu0
    %v362 = vadd.f32 0.0, %v361
    %363 = vmatmul.f32.gmra.mxu0 %v342
    %v364 = vpop.f32.mrf.mxu0
    %v365 = vadd.f32 0.0, %v364
    %366 = vdwg.mxu0
    %367 = vrot.lane.b32.xlu0 %v164, 112
    %v368 = vpop.permute.xlu0 %367
    %369 = vrot.lane.b32.xlu0 %v167, 112
    %v370 = vpop.permute.xlu0 %369
    %371 = vrot.lane.b32.xlu0 %v164, 80
    %v372 = vpop.permute.xlu0 %371
    %373 = vrot.lane.b32.xlu0 %v167, 80
    %v374 = vpop.permute.xlu0 %373
    %v375 = vsel %vm181, %v368, 0
    %v377 = vsel %vm181, %v370, 0
    %v379 = vsel %vm181, %v372, 0
    %v381 = vsel %vm181, %v374, 0
    %383 = vmatpush.xpose.msra.mxu0 0.0
    %384 = vmatpush.xpose.msra.mxu0 0.0
    %385 = vmatpush.xpose.msra.mxu0 0.0
    %386 = vmatpush.xpose.msra.mxu0 0.0
    %387 = vmatpush.xpose.msra.mxu0 0.0
    %388 = vmatpush.xpose.msra.mxu0 0.0
    %389 = vmatpush.xpose.msra.mxu0 0.0
    %390 = vmatpush.xpose.msra.mxu0 0.0
    %391 = vmatpush.xpose.msra.mxu0 0.0
    %392 = vmatpush.xpose.msra.mxu0 0.0
    %393 = vmatpush.xpose.msra.mxu0 0.0
    %394 = vmatpush.xpose.msra.mxu0 0.0
    %395 = vmatpush.xpose.msra.mxu0 0.0
    %396 = vmatpush.xpose.msra.mxu0 0.0
    %397 = vmatpush.xpose.msra.mxu0 %v381
    %398 = vmatpush.xpose.msra.mxu0 %v379
    %399 = vmatmul.f32.gmra.mxu0 %v375
    %v400 = vpop.f32.mrf.mxu0
    %v401 = vadd.f32 0.0, %v400
    %402 = vmatmul.f32.gmra.mxu0 %v377
    %v403 = vpop.f32.mrf.mxu0
    %v404 = vadd.f32 0.0, %v403
    %405 = vdwg.mxu0
    %v406 = vsel %vm213, %v401, -inf
    %407 = vmax.xlane.f32.xlu0 %v406
    %v408 = vpop.xlane.xlu0 %407
    %v409 = vsel %vm213, %v404, -inf
    %410 = vmax.xlane.f32.xlu0 %v409
    %v411 = vpop.xlane.xlu0 %410
    %v412 = vsub.f32 %v401, %v408
    %v413 = vsub.f32 %v404, %v411
    %v414 = vmul.f32 %v412, 1.442695
    %v415 = vpow.pop %v414
    %v416 = vmul.f32 %v413, 1.442695
    %v417 = vpow.pop %v416
    %v418 = vsel %vm213, %v415, 0.0
    %419 = vadd.xlane.f32.xlu0 %v418
    %v420 = vpop.xlane.xlu0 %419
    %v421 = vsel %vm213, %v417, 0.0
    %422 = vadd.xlane.f32.xlu0 %v421
    %v423 = vpop.xlane.xlu0 %422
    %v424 = vrcp.pop %v420
    %v425 = vrcp.pop %v423
    %v426 = vmul.f32 %v415, %v424
    %v427 = vmul.f32 %v417, %v425
    %428 = vrot.lane.b32.xlu0 %v164, 48
    %v429 = vpop.permute.xlu0 %428
    %430 = vrot.lane.b32.xlu0 %v167, 48
    %v431 = vpop.permute.xlu0 %430
    %v435 = vsel %vm213, %v426, 0
    %v438 = vsel %vm213, %v427, 0
    %440 = vmatpush.msra.mxu0 0.0
    %441 = vmatpush.msra.mxu0 0.0
    %442 = vmatpush.msra.mxu0 0.0
    %443 = vmatpush.msra.mxu0 0.0
    %444 = vmatpush.msra.mxu0 0.0
    %445 = vmatpush.msra.mxu0 0.0
    %446 = vmatpush.msra.mxu0 0.0
    %447 = vmatpush.msra.mxu0 0.0
    %448 = vmatpush.msra.mxu0 0.0
    %449 = vmatpush.msra.mxu0 0.0
    %450 = vmatpush.msra.mxu0 0.0
    %451 = vmatpush.msra.mxu0 0.0
    %452 = vmatpush.msra.mxu0 0.0
    %453 = vmatpush.msra.mxu0 0.0
    %454 = vmatpush.msra.mxu0 %v431
    %455 = vmatpush.msra.mxu0 %v429
    %456 = vmatmul.f32.gmra.mxu0 %v435
    %v457 = vpop.f32.mrf.mxu0
    %v458 = vadd.f32 0.0, %v457
    %459 = vmatmul.f32.gmra.mxu0 %v438
    %v460 = vpop.f32.mrf.mxu0
    %v461 = vadd.f32 0.0, %v460
    %462 = vdwg.mxu0
    %463 = vrot.lane.b32.xlu0 %v164, 104
    %v464 = vpop.permute.xlu0 %463
    %465 = vrot.lane.b32.xlu0 %v167, 104
    %v466 = vpop.permute.xlu0 %465
    %467 = vrot.lane.b32.xlu0 %v164, 72
    %v468 = vpop.permute.xlu0 %467
    %469 = vrot.lane.b32.xlu0 %v167, 72
    %v470 = vpop.permute.xlu0 %469
    %v471 = vsel %vm181, %v464, 0
    %v473 = vsel %vm181, %v466, 0
    %v475 = vsel %vm181, %v468, 0
    %v477 = vsel %vm181, %v470, 0
    %479 = vmatpush.xpose.msra.mxu0 0.0
    %480 = vmatpush.xpose.msra.mxu0 0.0
    %481 = vmatpush.xpose.msra.mxu0 0.0
    %482 = vmatpush.xpose.msra.mxu0 0.0
    %483 = vmatpush.xpose.msra.mxu0 0.0
    %484 = vmatpush.xpose.msra.mxu0 0.0
    %485 = vmatpush.xpose.msra.mxu0 0.0
    %486 = vmatpush.xpose.msra.mxu0 0.0
    %487 = vmatpush.xpose.msra.mxu0 0.0
    %488 = vmatpush.xpose.msra.mxu0 0.0
    %489 = vmatpush.xpose.msra.mxu0 0.0
    %490 = vmatpush.xpose.msra.mxu0 0.0
    %491 = vmatpush.xpose.msra.mxu0 0.0
    %492 = vmatpush.xpose.msra.mxu0 0.0
    %493 = vmatpush.xpose.msra.mxu0 %v477
    %494 = vmatpush.xpose.msra.mxu0 %v475
    %495 = vmatmul.f32.gmra.mxu0 %v471
    %v496 = vpop.f32.mrf.mxu0
    %v497 = vadd.f32 0.0, %v496
    %498 = vmatmul.f32.gmra.mxu0 %v473
    %v499 = vpop.f32.mrf.mxu0
    %v500 = vadd.f32 0.0, %v499
    %501 = vdwg.mxu0
    %v502 = vsel %vm213, %v497, -inf
    %503 = vmax.xlane.f32.xlu0 %v502
    %v504 = vpop.xlane.xlu0 %503
    %v505 = vsel %vm213, %v500, -inf
    %506 = vmax.xlane.f32.xlu0 %v505
    %v507 = vpop.xlane.xlu0 %506
    %v508 = vsub.f32 %v497, %v504
    %v509 = vsub.f32 %v500, %v507
    %v510 = vmul.f32 %v508, 1.442695
    %v511 = vpow.pop %v510
    %v512 = vmul.f32 %v509, 1.442695
    %v513 = vpow.pop %v512
    %v514 = vsel %vm213, %v511, 0.0
    %515 = vadd.xlane.f32.xlu0 %v514
    %v516 = vpop.xlane.xlu0 %515
    %v517 = vsel %vm213, %v513, 0.0
    %518 = vadd.xlane.f32.xlu0 %v517
    %v519 = vpop.xlane.xlu0 %518
    %v520 = vrcp.pop %v516
    %v521 = vrcp.pop %v519
    %v522 = vmul.f32 %v511, %v520
    %v523 = vmul.f32 %v513, %v521
    %524 = vrot.lane.b32.xlu0 %v164, 40
    %v525 = vpop.permute.xlu0 %524
    %526 = vrot.lane.b32.xlu0 %v167, 40
    %v527 = vpop.permute.xlu0 %526
    %v531 = vsel %vm213, %v522, 0
    %v534 = vsel %vm213, %v523, 0
    %536 = vmatpush.msra.mxu0 0.0
    %537 = vmatpush.msra.mxu0 0.0
    %538 = vmatpush.msra.mxu0 0.0
    %539 = vmatpush.msra.mxu0 0.0
    %540 = vmatpush.msra.mxu0 0.0
    %541 = vmatpush.msra.mxu0 0.0
    %542 = vmatpush.msra.mxu0 0.0
    %543 = vmatpush.msra.mxu0 0.0
    %544 = vmatpush.msra.mxu0 0.0
    %545 = vmatpush.msra.mxu0 0.0
    %546 = vmatpush.msra.mxu0 0.0
    %547 = vmatpush.msra.mxu0 0.0
    %548 = vmatpush.msra.mxu0 0.0
    %549 = vmatpush.msra.mxu0 0.0
    %550 = vmatpush.msra.mxu0 %v527
    %551 = vmatpush.msra.mxu0 %v525
    %552 = vmatmul.f32.gmra.mxu0 %v531
    %v553 = vpop.f32.mrf.mxu0
    %v554 = vadd.f32 0.0, %v553
    %555 = vmatmul.f32.gmra.mxu0 %v534
    %v556 = vpop.f32.mrf.mxu0
    %v557 = vadd.f32 0.0, %v556
    %558 = vdwg.mxu0
    %561 = vrot.lane.b32.xlu0 %v362, 8
    %v562 = vpop.permute.xlu0 %561
    %563 = vrot.lane.b32.xlu0 %v365, 8
    %v564 = vpop.permute.xlu0 %563
    %569 = vrot.lane.b32.xlu0 %v458, 16
    %v570 = vpop.permute.xlu0 %569
    %571 = vrot.lane.b32.xlu0 %v461, 16
    %v572 = vpop.permute.xlu0 %571
    %577 = vrot.lane.b32.xlu0 %v554, 24
    %v578 = vpop.permute.xlu0 %577
    %579 = vrot.lane.b32.xlu0 %v557, 24
    %v580 = vpop.permute.xlu0 %579
    %v583 = vsel %vm181, %v266, %v562
    %v584 = vsel %vm181, %v269, %v564
    %v585 = vsel %vm213, %v583, %v570
    %v586 = vsel %vm213, %v584, %v572
    %vm587 = vcmask 195584
    %v588 = vsel %vm587, %v585, %v578
    %v589 = vsel %vm587, %v586, %v580
    %592 = vrot.lane.b32.xlu0 %v170, 96
    %v593 = vpop.permute.xlu0 %592
    %594 = vrot.lane.b32.xlu0 %v173, 96
    %v595 = vpop.permute.xlu0 %594
    %v596 = vsel %vm181, %v170, 0
    %v598 = vsel %vm181, %v173, 0
    %v600 = vsel %vm181, %v593, 0
    %v602 = vsel %vm181, %v595, 0
    %604 = vmatpush.xpose.msra.mxu0 0.0
    %605 = vmatpush.xpose.msra.mxu0 0.0
    %606 = vmatpush.xpose.msra.mxu0 0.0
    %607 = vmatpush.xpose.msra.mxu0 0.0
    %608 = vmatpush.xpose.msra.mxu0 0.0
    %609 = vmatpush.xpose.msra.mxu0 0.0
    %610 = vmatpush.xpose.msra.mxu0 0.0
    %611 = vmatpush.xpose.msra.mxu0 0.0
    %612 = vmatpush.xpose.msra.mxu0 0.0
    %613 = vmatpush.xpose.msra.mxu0 0.0
    %614 = vmatpush.xpose.msra.mxu0 0.0
    %615 = vmatpush.xpose.msra.mxu0 0.0
    %616 = vmatpush.xpose.msra.mxu0 0.0
    %617 = vmatpush.xpose.msra.mxu0 0.0
    %618 = vmatpush.xpose.msra.mxu0 %v602
    %619 = vmatpush.xpose.msra.mxu0 %v600
    %620 = vmatmul.f32.gmra.mxu0 %v596
    %v621 = vpop.f32.mrf.mxu0
    %v622 = vadd.f32 0.0, %v621
    %623 = vmatmul.f32.gmra.mxu0 %v598
    %v624 = vpop.f32.mrf.mxu0
    %v625 = vadd.f32 0.0, %v624
    %626 = vdwg.mxu0
    %v627 = vsel %vm213, %v622, -inf
    %628 = vmax.xlane.f32.xlu0 %v627
    %v629 = vpop.xlane.xlu0 %628
    %v630 = vsel %vm213, %v625, -inf
    %631 = vmax.xlane.f32.xlu0 %v630
    %v632 = vpop.xlane.xlu0 %631
    %v633 = vsub.f32 %v622, %v629
    %v634 = vsub.f32 %v625, %v632
    %v635 = vmul.f32 %v633, 1.442695
    %v636 = vpow.pop %v635
    %v637 = vmul.f32 %v634, 1.442695
    %v638 = vpow.pop %v637
    %v639 = vsel %vm213, %v636, 0.0
    %640 = vadd.xlane.f32.xlu0 %v639
    %v641 = vpop.xlane.xlu0 %640
    %v642 = vsel %vm213, %v638, 0.0
    %643 = vadd.xlane.f32.xlu0 %v642
    %v644 = vpop.xlane.xlu0 %643
    %v645 = vrcp.pop %v641
    %v646 = vrcp.pop %v644
    %v647 = vmul.f32 %v636, %v645
    %v648 = vmul.f32 %v638, %v646
    %649 = vrot.lane.b32.xlu0 %v170, 64
    %v650 = vpop.permute.xlu0 %649
    %651 = vrot.lane.b32.xlu0 %v173, 64
    %v652 = vpop.permute.xlu0 %651
    %v656 = vsel %vm213, %v647, 0
    %v659 = vsel %vm213, %v648, 0
    %661 = vmatpush.msra.mxu0 0.0
    %662 = vmatpush.msra.mxu0 0.0
    %663 = vmatpush.msra.mxu0 0.0
    %664 = vmatpush.msra.mxu0 0.0
    %665 = vmatpush.msra.mxu0 0.0
    %666 = vmatpush.msra.mxu0 0.0
    %667 = vmatpush.msra.mxu0 0.0
    %668 = vmatpush.msra.mxu0 0.0
    %669 = vmatpush.msra.mxu0 0.0
    %670 = vmatpush.msra.mxu0 0.0
    %671 = vmatpush.msra.mxu0 0.0
    %672 = vmatpush.msra.mxu0 0.0
    %673 = vmatpush.msra.mxu0 0.0
    %674 = vmatpush.msra.mxu0 0.0
    %675 = vmatpush.msra.mxu0 %v652
    %676 = vmatpush.msra.mxu0 %v650
    %677 = vmatmul.f32.gmra.mxu0 %v656
    %v678 = vpop.f32.mrf.mxu0
    %v679 = vadd.f32 0.0, %v678
    %680 = vmatmul.f32.gmra.mxu0 %v659
    %v681 = vpop.f32.mrf.mxu0
    %v682 = vadd.f32 0.0, %v681
    %683 = vdwg.mxu0
    %684 = vrot.lane.b32.xlu0 %v170, 120
    %v685 = vpop.permute.xlu0 %684
    %686 = vrot.lane.b32.xlu0 %v173, 120
    %v687 = vpop.permute.xlu0 %686
    %688 = vrot.lane.b32.xlu0 %v170, 88
    %v689 = vpop.permute.xlu0 %688
    %690 = vrot.lane.b32.xlu0 %v173, 88
    %v691 = vpop.permute.xlu0 %690
    %v692 = vsel %vm181, %v685, 0
    %v694 = vsel %vm181, %v687, 0
    %v696 = vsel %vm181, %v689, 0
    %v698 = vsel %vm181, %v691, 0
    %700 = vmatpush.xpose.msra.mxu0 0.0
    %701 = vmatpush.xpose.msra.mxu0 0.0
    %702 = vmatpush.xpose.msra.mxu0 0.0
    %703 = vmatpush.xpose.msra.mxu0 0.0
    %704 = vmatpush.xpose.msra.mxu0 0.0
    %705 = vmatpush.xpose.msra.mxu0 0.0
    %706 = vmatpush.xpose.msra.mxu0 0.0
    %707 = vmatpush.xpose.msra.mxu0 0.0
    %708 = vmatpush.xpose.msra.mxu0 0.0
    %709 = vmatpush.xpose.msra.mxu0 0.0
    %710 = vmatpush.xpose.msra.mxu0 0.0
    %711 = vmatpush.xpose.msra.mxu0 0.0
    %712 = vmatpush.xpose.msra.mxu0 0.0
    %713 = vmatpush.xpose.msra.mxu0 0.0
    %714 = vmatpush.xpose.msra.mxu0 %v698
    %715 = vmatpush.xpose.msra.mxu0 %v696
    %716 = vmatmul.f32.gmra.mxu0 %v692
    %v717 = vpop.f32.mrf.mxu0
    %v718 = vadd.f32 0.0, %v717
    %719 = vmatmul.f32.gmra.mxu0 %v694
    %v720 = vpop.f32.mrf.mxu0
    %v721 = vadd.f32 0.0, %v720
    %722 = vdwg.mxu0
    %v723 = vsel %vm213, %v718, -inf
    %724 = vmax.xlane.f32.xlu0 %v723
    %v725 = vpop.xlane.xlu0 %724
    %v726 = vsel %vm213, %v721, -inf
    %727 = vmax.xlane.f32.xlu0 %v726
    %v728 = vpop.xlane.xlu0 %727
    %v729 = vsub.f32 %v718, %v725
    %v730 = vsub.f32 %v721, %v728
    %v731 = vmul.f32 %v729, 1.442695
    %v732 = vpow.pop %v731
    %v733 = vmul.f32 %v730, 1.442695
    %v734 = vpow.pop %v733
    %v735 = vsel %vm213, %v732, 0.0
    %736 = vadd.xlane.f32.xlu0 %v735
    %v737 = vpop.xlane.xlu0 %736
    %v738 = vsel %vm213, %v734, 0.0
    %739 = vadd.xlane.f32.xlu0 %v738
    %v740 = vpop.xlane.xlu0 %739
    %v741 = vrcp.pop %v737
    %v742 = vrcp.pop %v740
    %v743 = vmul.f32 %v732, %v741
    %v744 = vmul.f32 %v734, %v742
    %745 = vrot.lane.b32.xlu0 %v170, 56
    %v746 = vpop.permute.xlu0 %745
    %747 = vrot.lane.b32.xlu0 %v173, 56
    %v748 = vpop.permute.xlu0 %747
    %v752 = vsel %vm213, %v743, 0
    %v755 = vsel %vm213, %v744, 0
    %757 = vmatpush.msra.mxu0 0.0
    %758 = vmatpush.msra.mxu0 0.0
    %759 = vmatpush.msra.mxu0 0.0
    %760 = vmatpush.msra.mxu0 0.0
    %761 = vmatpush.msra.mxu0 0.0
    %762 = vmatpush.msra.mxu0 0.0
    %763 = vmatpush.msra.mxu0 0.0
    %764 = vmatpush.msra.mxu0 0.0
    %765 = vmatpush.msra.mxu0 0.0
    %766 = vmatpush.msra.mxu0 0.0
    %767 = vmatpush.msra.mxu0 0.0
    %768 = vmatpush.msra.mxu0 0.0
    %769 = vmatpush.msra.mxu0 0.0
    %770 = vmatpush.msra.mxu0 0.0
    %771 = vmatpush.msra.mxu0 %v748
    %772 = vmatpush.msra.mxu0 %v746
    %773 = vmatmul.f32.gmra.mxu0 %v752
    %v774 = vpop.f32.mrf.mxu0
    %v775 = vadd.f32 0.0, %v774
    %776 = vmatmul.f32.gmra.mxu0 %v755
    %v777 = vpop.f32.mrf.mxu0
    %v778 = vadd.f32 0.0, %v777
    %779 = vdwg.mxu0
    %780 = vrot.lane.b32.xlu0 %v170, 112
    %v781 = vpop.permute.xlu0 %780
    %782 = vrot.lane.b32.xlu0 %v173, 112
    %v783 = vpop.permute.xlu0 %782
    %784 = vrot.lane.b32.xlu0 %v170, 80
    %v785 = vpop.permute.xlu0 %784
    %786 = vrot.lane.b32.xlu0 %v173, 80
    %v787 = vpop.permute.xlu0 %786
    %v788 = vsel %vm181, %v781, 0
    %v790 = vsel %vm181, %v783, 0
    %v792 = vsel %vm181, %v785, 0
    %v794 = vsel %vm181, %v787, 0
    %796 = vmatpush.xpose.msra.mxu0 0.0
    %797 = vmatpush.xpose.msra.mxu0 0.0
    %798 = vmatpush.xpose.msra.mxu0 0.0
    %799 = vmatpush.xpose.msra.mxu0 0.0
    %800 = vmatpush.xpose.msra.mxu0 0.0
    %801 = vmatpush.xpose.msra.mxu0 0.0
    %802 = vmatpush.xpose.msra.mxu0 0.0
    %803 = vmatpush.xpose.msra.mxu0 0.0
    %804 = vmatpush.xpose.msra.mxu0 0.0
    %805 = vmatpush.xpose.msra.mxu0 0.0
    %806 = vmatpush.xpose.msra.mxu0 0.0
    %807 = vmatpush.xpose.msra.mxu0 0.0
    %808 = vmatpush.xpose.msra.mxu0 0.0
    %809 = vmatpush.xpose.msra.mxu0 0.0
    %810 = vmatpush.xpose.msra.mxu0 %v794
    %811 = vmatpush.xpose.msra.mxu0 %v792
    %812 = vmatmul.f32.gmra.mxu0 %v788
    %v813 = vpop.f32.mrf.mxu0
    %v814 = vadd.f32 0.0, %v813
    %815 = vmatmul.f32.gmra.mxu0 %v790
    %v816 = vpop.f32.mrf.mxu0
    %v817 = vadd.f32 0.0, %v816
    %818 = vdwg.mxu0
    %v819 = vsel %vm213, %v814, -inf
    %820 = vmax.xlane.f32.xlu0 %v819
    %v821 = vpop.xlane.xlu0 %820
    %v822 = vsel %vm213, %v817, -inf
    %823 = vmax.xlane.f32.xlu0 %v822
    %v824 = vpop.xlane.xlu0 %823
    %v825 = vsub.f32 %v814, %v821
    %v826 = vsub.f32 %v817, %v824
    %v827 = vmul.f32 %v825, 1.442695
    %v828 = vpow.pop %v827
    %v829 = vmul.f32 %v826, 1.442695
    %v830 = vpow.pop %v829
    %v831 = vsel %vm213, %v828, 0.0
    %832 = vadd.xlane.f32.xlu0 %v831
    %v833 = vpop.xlane.xlu0 %832
    %v834 = vsel %vm213, %v830, 0.0
    %835 = vadd.xlane.f32.xlu0 %v834
    %v836 = vpop.xlane.xlu0 %835
    %v837 = vrcp.pop %v833
    %v838 = vrcp.pop %v836
    %v839 = vmul.f32 %v828, %v837
    %v840 = vmul.f32 %v830, %v838
    %841 = vrot.lane.b32.xlu0 %v170, 48
    %v842 = vpop.permute.xlu0 %841
    %843 = vrot.lane.b32.xlu0 %v173, 48
    %v844 = vpop.permute.xlu0 %843
    %v848 = vsel %vm213, %v839, 0
    %v851 = vsel %vm213, %v840, 0
    %853 = vmatpush.msra.mxu0 0.0
    %854 = vmatpush.msra.mxu0 0.0
    %855 = vmatpush.msra.mxu0 0.0
    %856 = vmatpush.msra.mxu0 0.0
    %857 = vmatpush.msra.mxu0 0.0
    %858 = vmatpush.msra.mxu0 0.0
    %859 = vmatpush.msra.mxu0 0.0
    %860 = vmatpush.msra.mxu0 0.0
    %861 = vmatpush.msra.mxu0 0.0
    %862 = vmatpush.msra.mxu0 0.0
    %863 = vmatpush.msra.mxu0 0.0
    %864 = vmatpush.msra.mxu0 0.0
    %865 = vmatpush.msra.mxu0 0.0
    %866 = vmatpush.msra.mxu0 0.0
    %867 = vmatpush.msra.mxu0 %v844
    %868 = vmatpush.msra.mxu0 %v842
    %869 = vmatmul.f32.gmra.mxu0 %v848
    %v870 = vpop.f32.mrf.mxu0
    %v871 = vadd.f32 0.0, %v870
    %872 = vmatmul.f32.gmra.mxu0 %v851
    %v873 = vpop.f32.mrf.mxu0
    %v874 = vadd.f32 0.0, %v873
    %875 = vdwg.mxu0
    %876 = vrot.lane.b32.xlu0 %v170, 104
    %v877 = vpop.permute.xlu0 %876
    %878 = vrot.lane.b32.xlu0 %v173, 104
    %v879 = vpop.permute.xlu0 %878
    %880 = vrot.lane.b32.xlu0 %v170, 72
    %v881 = vpop.permute.xlu0 %880
    %882 = vrot.lane.b32.xlu0 %v173, 72
    %v883 = vpop.permute.xlu0 %882
    %v884 = vsel %vm181, %v877, 0
    %v886 = vsel %vm181, %v879, 0
    %v888 = vsel %vm181, %v881, 0
    %v890 = vsel %vm181, %v883, 0
    %892 = vmatpush.xpose.msra.mxu0 0.0
    %893 = vmatpush.xpose.msra.mxu0 0.0
    %894 = vmatpush.xpose.msra.mxu0 0.0
    %895 = vmatpush.xpose.msra.mxu0 0.0
    %896 = vmatpush.xpose.msra.mxu0 0.0
    %897 = vmatpush.xpose.msra.mxu0 0.0
    %898 = vmatpush.xpose.msra.mxu0 0.0
    %899 = vmatpush.xpose.msra.mxu0 0.0
    %900 = vmatpush.xpose.msra.mxu0 0.0
    %901 = vmatpush.xpose.msra.mxu0 0.0
    %902 = vmatpush.xpose.msra.mxu0 0.0
    %903 = vmatpush.xpose.msra.mxu0 0.0
    %904 = vmatpush.xpose.msra.mxu0 0.0
    %905 = vmatpush.xpose.msra.mxu0 0.0
    %906 = vmatpush.xpose.msra.mxu0 %v890
    %907 = vmatpush.xpose.msra.mxu0 %v888
    %908 = vmatmul.f32.gmra.mxu0 %v884
    %v909 = vpop.f32.mrf.mxu0
    %v910 = vadd.f32 0.0, %v909
    %911 = vmatmul.f32.gmra.mxu0 %v886
    %v912 = vpop.f32.mrf.mxu0
    %v913 = vadd.f32 0.0, %v912
    %914 = vdwg.mxu0
    %v915 = vsel %vm213, %v910, -inf
    %916 = vmax.xlane.f32.xlu0 %v915
    %v917 = vpop.xlane.xlu0 %916
    %v918 = vsel %vm213, %v913, -inf
    %919 = vmax.xlane.f32.xlu0 %v918
    %v920 = vpop.xlane.xlu0 %919
    %v921 = vsub.f32 %v910, %v917
    %v922 = vsub.f32 %v913, %v920
    %v923 = vmul.f32 %v921, 1.442695
    %v924 = vpow.pop %v923
    %v925 = vmul.f32 %v922, 1.442695
    %v926 = vpow.pop %v925
    %v927 = vsel %vm213, %v924, 0.0
    %928 = vadd.xlane.f32.xlu0 %v927
    %v929 = vpop.xlane.xlu0 %928
    %v930 = vsel %vm213, %v926, 0.0
    %931 = vadd.xlane.f32.xlu0 %v930
    %v932 = vpop.xlane.xlu0 %931
    %v933 = vrcp.pop %v929
    %v934 = vrcp.pop %v932
    %v935 = vmul.f32 %v924, %v933
    %v936 = vmul.f32 %v926, %v934
    %937 = vrot.lane.b32.xlu0 %v170, 40
    %v938 = vpop.permute.xlu0 %937
    %939 = vrot.lane.b32.xlu0 %v173, 40
    %v940 = vpop.permute.xlu0 %939
    %v944 = vsel %vm213, %v935, 0
    %v947 = vsel %vm213, %v936, 0
    %949 = vmatpush.msra.mxu0 0.0
    %950 = vmatpush.msra.mxu0 0.0
    %951 = vmatpush.msra.mxu0 0.0
    %952 = vmatpush.msra.mxu0 0.0
    %953 = vmatpush.msra.mxu0 0.0
    %954 = vmatpush.msra.mxu0 0.0
    %955 = vmatpush.msra.mxu0 0.0
    %956 = vmatpush.msra.mxu0 0.0
    %957 = vmatpush.msra.mxu0 0.0
    %958 = vmatpush.msra.mxu0 0.0
    %959 = vmatpush.msra.mxu0 0.0
    %960 = vmatpush.msra.mxu0 0.0
    %961 = vmatpush.msra.mxu0 0.0
    %962 = vmatpush.msra.mxu0 0.0
    %963 = vmatpush.msra.mxu0 %v940
    %964 = vmatpush.msra.mxu0 %v938
    %965 = vmatmul.f32.gmra.mxu0 %v944
    %v966 = vpop.f32.mrf.mxu0
    %v967 = vadd.f32 0.0, %v966
    %968 = vmatmul.f32.gmra.mxu0 %v947
    %v969 = vpop.f32.mrf.mxu0
    %v970 = vadd.f32 0.0, %v969
    %971 = vdwg.mxu0
    %974 = vrot.lane.b32.xlu0 %v775, 8
    %v975 = vpop.permute.xlu0 %974
    %976 = vrot.lane.b32.xlu0 %v778, 8
    %v977 = vpop.permute.xlu0 %976
    %982 = vrot.lane.b32.xlu0 %v871, 16
    %v983 = vpop.permute.xlu0 %982
    %984 = vrot.lane.b32.xlu0 %v874, 16
    %v985 = vpop.permute.xlu0 %984
    %990 = vrot.lane.b32.xlu0 %v967, 24
    %v991 = vpop.permute.xlu0 %990
    %992 = vrot.lane.b32.xlu0 %v970, 24
    %v993 = vpop.permute.xlu0 %992
    %v996 = vsel %vm181, %v679, %v975
    %v997 = vsel %vm181, %v682, %v977
    %v998 = vsel %vm213, %v996, %v983
    %v999 = vsel %vm213, %v997, %v985
    %v1000 = vsel %vm587, %v998, %v991
    %v1001 = vsel %vm587, %v999, %v993
    %s1002 = scalar_lea.vmem [#allocation7], 32
    %v1003 = vld [vmem:[%s1002] sm:$0xff]
    %v1004 = vld [vmem:[%s1002 + $0x8] sm:$0xff]
    %v1005 = vld [vmem:[%s1002 + $0x10] sm:$0xff]
    %v1006 = vld [vmem:[%s1002 + $0x18] sm:$0xff]
    %v1007 = vld [vmem:[%s3 + $0x1] sm:$0x1]
    %v1008 = vperm.slane %v1007, 0
    %v1010 = vsel %vm84, %v588, 0
    %v1013 = vsel %vm84, %v589, 0
    %v1016 = vsel %vm84, %v1000, 0
    %v1019 = vsel %vm84, %v1001, 0
    %1021 = vmatpush.msra.mxu0 0.0
    %1022 = vmatpush.msra.mxu0 0.0
    %1023 = vmatpush.msra.mxu0 0.0
    %1024 = vmatpush.msra.mxu0 0.0
    %1025 = vmatpush.msra.mxu0 0.0
    %1026 = vmatpush.msra.mxu0 0.0
    %1027 = vmatpush.msra.mxu0 0.0
    %1028 = vmatpush.msra.mxu0 0.0
    %1029 = vmatpush.msra.mxu0 0.0
    %1030 = vmatpush.msra.mxu0 0.0
    %1031 = vmatpush.msra.mxu0 0.0
    %1032 = vmatpush.msra.mxu0 0.0
    %1033 = vmatpush.msra.mxu0 %v1006
    %1034 = vmatpush.msra.mxu0 %v1005
    %1035 = vmatpush.msra.mxu0 %v1004
    %1036 = vmatpush.msra.mxu0 %v1003
    %1037 = vmatmul.f32.gmra.mxu0 %v1010
    %v1038 = vpop.f32.mrf.mxu0
    %v1039 = vadd.f32 %v1008, %v1038
    %1040 = vmatmul.f32.gmra.mxu0 %v1013
    %v1041 = vpop.f32.mrf.mxu0
    %v1042 = vadd.f32 %v1008, %v1041
    %1043 = vmatmul.f32.gmra.mxu0 %v1016
    %v1044 = vpop.f32.mrf.mxu0
    %v1045 = vadd.f32 %v1008, %v1044
    %1046 = vmatmul.f32.gmra.mxu0 %v1019
    %v1047 = vpop.f32.mrf.mxu0
    %v1048 = vadd.f32 %v1008, %v1047
    %1049 = vdwg.mxu0
    %v1050 = vadd.f32 %v1039, %v65
    %v1051 = vadd.f32 %v1042, %v66
    %v1052 = vadd.f32 %v1045, %v67
    %v1053 = vadd.f32 %v1048, %v68
    %1054 = vst.msk [vmem:[#allocation8] sm:$0xff] %vm84, %v1050
    %1055 = vst.msk [vmem:[#allocation8 + $0x8] sm:$0xff] %vm84, %v1051
    %1056 = vst.msk [vmem:[#allocation8 + $0x10] sm:$0xff] %vm84, %v1052
    %1057 = vst.msk [vmem:[#allocation8 + $0x18] sm:$0xff] %vm84, %v1053
    // Predicated region
    $region30: #{tpu_custom_call.1} parent=1 // pred_check
      _
    $region31: #{tpu_custom_call.1} parent=1 // pred_check_branch
      %1059 = sbr.rel (0) target = $region33
    $region32: #{tpu_custom_call.1} parent=1 // pred_region
      %1061 = vsyncadd [#allocation4], 0
      %s1062 = sshll.u32 [#allocation8], 4
      %s1063 = int_to_ptr.vmem [resolvable:$true] %s1062
      %s1064 = sshll.u32 %s4, 4
      %s1065 = int_to_ptr.hbm [resolvable:$true] %s1064
      %1070 = dma.vmem_to_hbm [thread:$0]  %s1063, 512, %s1065, [#allocation4], 128, 128, 8
    $region33: #{tpu_custom_call.1} parent=1 // pred_fallthru
      _
    // Predicated region
    $region34: #{tpu_custom_call.1} parent=1 // pred_check
      _
    $region35: #{tpu_custom_call.1} parent=1 // pred_check_branch
      %1072 = sbr.rel (0) target = $region37
    $region36: #{tpu_custom_call.1} parent=1 // pred_region
      %1074 = dma.done [#allocation4], 512
    $region37: #{tpu_custom_call.1} parent=1 // pred_fallthru
      _
    %1075 = vsyncpa [#allocation3], 1
    %1076 = vsyncpa [#allocation6], 1
    %1077 = vsyncpa [#allocation4], 1

</llo_original>
